<compile_context>
chip_gen: v7x
topology: tpu7x:2x2x1
jax: 0.10.0
libtpu: 0.0.40
codegen_flags: <defaults>
</compile_context>

<pallas_src>
import functools

import numpy as np
import jax
import jax.numpy as jnp
from jax import lax
from jax.experimental import pallas as pl
from jax.experimental.pallas import tpu as pltpu

LANE = 128
VMEM_LIMIT = 48 * 1024 * 1024   # above default scoped VMEM, below v7x 64 MiB physical
EPS_CONV = 1e-3                 # BN eps inside ultralytics Conv
EPS_BN = 1e-5                   # standalone self.bn eps (PyTorch default)


def _round_up(v, m):
    return ((v + m - 1) // m) * m


def _silu(x):
    return x * jax.nn.sigmoid(x)


# ----------------------------- Pallas kernels -----------------------------

def _conv1x1_bias_silu_kernel(x_ref, w_ref, b_ref, o_ref):
    # o = SiLU(x @ w + b)   (BN folded into w/b)
    x = x_ref[...].astype(jnp.bfloat16)
    y = jnp.dot(x, w_ref[...], preferred_element_type=jnp.float32) + b_ref[...]
    o_ref[...] = _silu(y).astype(o_ref.dtype)


def _csp_tail_kernel(z_ref, x_ref, w3_ref, b3_ref, w2_ref, b2_ref,
                     w4a_ref, w4b_ref, b4_ref, o_ref):
    # Fused: y1 = bn(cv3(z)); y2 = bn(cv2(x)); out = cv4(SiLU(cat(y1, y2)))
    z = z_ref[...].astype(jnp.bfloat16)
    x = x_ref[...].astype(jnp.bfloat16)
    y1 = jnp.dot(z, w3_ref[...], preferred_element_type=jnp.float32) + b3_ref[...]
    y2 = jnp.dot(x, w2_ref[...], preferred_element_type=jnp.float32) + b2_ref[...]
    a1 = _silu(y1).astype(jnp.bfloat16)
    a2 = _silu(y2).astype(jnp.bfloat16)
    h = (jnp.dot(a1, w4a_ref[...], preferred_element_type=jnp.float32)
         + jnp.dot(a2, w4b_ref[...], preferred_element_type=jnp.float32)
         + b4_ref[...])
    o_ref[...] = _silu(h).astype(o_ref.dtype)


def _conv3x3_bias_silu_kernel(x_hbm, w_ref, b_ref, *rest, add_residual):
    # 3x3 conv (stride 1, pad 1) + folded BN bias + SiLU (+ residual), computed from a
    # manually double-buffered (th+2)-row halo tile of the spatially padded input.
    if add_residual:
        r_ref, o_ref, xbuf, sem = rest
    else:
        o_ref, xbuf, sem = rest
        r_ref = None

    img = pl.program_id(0)
    j = pl.program_id(1)
    n_j = pl.num_programs(1)
    _, th, wd, cp = o_ref.shape
    halo = xbuf.shape[1]  # th + 2

    def halo_copy(row_blk, slot):
        return pltpu.make_async_copy(
            x_hbm.at[img, pl.ds(row_blk * th, halo)],
            xbuf.at[slot],
            sem.at[slot])

    slot = j % 2

    @pl.when(j == 0)              # prime the pipeline for this image
    def _():
        halo_copy(0, 0).start()

    halo_copy(j, slot).wait()     # current halo tile ready

    @pl.when(j + 1 < n_j)         # prefetch next row block behind the MXU work
    def _():
        halo_copy(j + 1, 1 - slot).start()

    cur = xbuf.at[slot]
    # Three width-shifted views concatenated along channels -> 3 matmuls with K = 3*cp
    # (instead of 9 with K = cp); the per-dy row slices below are cheap aligned slices.
    shifts = [cur[:, dx:dx + wd, :].reshape(halo * wd, cp) for dx in range(3)]
    lhs_all = jnp.concatenate(shifts, axis=-1)            # (halo*wd, 3*cp), bf16

    acc = jnp.zeros((th * wd, cp), jnp.float32)
    for dy in range(3):
        lhs = lhs_all[dy * wd:dy * wd + th * wd, :]
        acc = acc + jnp.dot(lhs, w_ref[dy * 3 * cp:(dy + 1) * 3 * cp, :],
                            preferred_element_type=jnp.float32)

    y = _silu(acc + b_ref[...]).reshape(1, th, wd, cp)
    if add_residual:
        y = y + r_ref[...].astype(jnp.float32)
    o_ref[...] = y.astype(o_ref.dtype)


# ----------------------------- pallas_call wrappers -----------------------------

def _row_blocked_call(kernel, row_args, full_args, out_cols, out_dtype, M,
                      flops, transcendentals, tm=512):
    """Row-tiled matmul-style call: row_args (M, K_i) are blocked over rows, full_args
    (weights / biases, grid-invariant index_map) stay resident in VMEM."""
    tm = min(tm, _round_up(M, 8))
    m_pad = _round_up(M, tm)
    if m_pad != M:
        row_args = [jnp.pad(a, ((0, m_pad - M), (0, 0))) for a in row_args]
    grid = (m_pad // tm,)

    in_specs = [pl.BlockSpec((tm, a.shape[1]), lambda i: (i, 0)) for a in row_args]
    in_specs += [pl.BlockSpec(a.shape, lambda i: (0, 0)) for a in full_args]

    bytes_accessed = sum(int(a.size) * a.dtype.itemsize for a in row_args)
    bytes_accessed += sum(int(a.size) * a.dtype.itemsize for a in full_args)
    bytes_accessed += m_pad * out_cols * np.dtype(out_dtype).itemsize

    out = pl.pallas_call(
        kernel,
        out_shape=jax.ShapeDtypeStruct((m_pad, out_cols), out_dtype),
        grid=grid,
        in_specs=in_specs,
        out_specs=pl.BlockSpec((tm, out_cols), lambda i: (i, 0)),
        compiler_params=pltpu.CompilerParams(
            dimension_semantics=("parallel",),
            vmem_limit_bytes=VMEM_LIMIT),
        cost_estimate=pl.CostEstimate(
            flops=int(flops),
            transcendentals=int(transcendentals),
            bytes_accessed=int(bytes_accessed)),
    )(*row_args, *full_args)
    return out[:M] if m_pad != M else out


def _pick_th(h):
    for th in (16, 8, 4, 2, 1):
        if h % th == 0 and h // th >= 2:
            return th
    return h


def _conv3x3_bn_silu(z_nhwc, w_taps, bias, residual=None):
    n, h, w, cp = z_nhwc.shape
    th = _pick_th(h)
    n_hb = h // th
    xp = jnp.pad(z_nhwc, ((0, 0), (1, 1), (1, 1), (0, 0)))  # spatial halo only

    kernel = functools.partial(_conv3x3_bias_silu_kernel,
                               add_residual=residual is not None)
    in_specs = [
        pl.BlockSpec(memory_space=pl.ANY),                 # padded input: manual halo DMA
        pl.BlockSpec((9 * cp, cp), lambda i, j: (0, 0)),   # folded 3x3 weights (resident)
        pl.BlockSpec((1, cp), lambda i, j: (0, 0)),        # folded bias (resident)
    ]
    args = [xp, w_taps, bias]
    if residual is not None:
        in_specs.append(pl.BlockSpec((1, th, w, cp), lambda i, j: (i, j, 0, 0)))
        args.append(residual)

    flops = 2 * n * h * w * 9 * cp * cp
    bytes_accessed = (int(xp.size) * xp.dtype.itemsize
                      + int(w_taps.size) * w_taps.dtype.itemsize
                      + 2 * n * h * w * cp * 2)

    return pl.pallas_call(
        kernel,
        out_shape=jax.ShapeDtypeStruct((n, h, w, cp), jnp.bfloat16),
        grid=(n, n_hb),
        in_specs=in_specs,
        out_specs=pl.BlockSpec((1, th, w, cp), lambda i, j: (i, j, 0, 0)),
        scratch_shapes=[
            pltpu.VMEM((2, th + 2, w + 2, cp), jnp.bfloat16),  # double-buffered halo tile
            pltpu.SemaphoreType.DMA((2,)),
        ],
        compiler_params=pltpu.CompilerParams(
            dimension_semantics=("parallel", "arbitrary"),
            vmem_limit_bytes=VMEM_LIMIT),
        cost_estimate=pl.CostEstimate(
            flops=int(flops),
            transcendentals=int(n * h * w * cp),
            bytes_accessed=int(bytes_accessed)),
    )(*args)


# ----------------------------- parameters / folding -----------------------------

def make_raw_params(key, c1, c2, n, e=0.5):
    """Synthetic PyTorch-layout weights for BottleneckCSP (BN stats are fresh-init)."""
    c_ = int(c2 * e)
    keys = jax.random.split(key, 4 + 2 * n)

    def w(k, shape):
        return 0.1 * jax.random.normal(k, shape, jnp.float32)

    return {
        "cv1_w": w(keys[0], (c_, c1, 1, 1)),
        "cv2_w": w(keys[1], (c_, c1, 1, 1)),
        "cv3_w": w(keys[2], (c_, c_, 1, 1)),
        "cv4_w": w(keys[3], (c2, 2 * c_, 1, 1)),
        "m": [(w(keys[4 + 2 * i], (c_, c_, 3, 3)),
               w(keys[5 + 2 * i], (c_, c_, 3, 3))) for i in range(n)],
    }


def _bn_scale_shift(eps, c):
    # Fresh-init BatchNorm stats: gamma=1, beta=0, running_mean=0, running_var=1.
    gamma = jnp.ones((c,), jnp.float32)
    beta = jnp.zeros((c,), jnp.float32)
    mean = jnp.zeros((c,), jnp.float32)
    var = jnp.ones((c,), jnp.float32)
    scale = gamma / jnp.sqrt(var + eps)
    return scale, beta - mean * scale


def _pad2(w, rows, cols):
    return jnp.pad(w, ((0, rows - w.shape[0]), (0, cols - w.shape[1])))


def _pad_bias(b, cols):
    return jnp.pad(b, (0, cols - b.shape[0]))[None, :].astype(jnp.float32)


def _fold_1x1(w_oihw, scale):
    # (co, ci, 1, 1) -> (ci, co) with per-output-channel scale folded in.
    return jnp.transpose(w_oihw[:, :, 0, 0], (1, 0)) * scale[None, :]


def _fold_3x3(w_oihw, eps, cpad):
    co, ci = w_oihw.shape[:2]
    scale, shift = _bn_scale_shift(eps, co)
    wt = jnp.transpose(w_oihw, (2, 3, 1, 0)) * scale[None, None, None, :]  # (kh,kw,ci,co)
    wt = jnp.pad(wt, ((0, 0), (0, 0), (0, cpad - ci), (0, cpad - co)))
    return wt.reshape(9 * cpad, cpad).astype(jnp.bfloat16), _pad_bias(shift, cpad)


def prepare_kernel_params(raw, c1, c2, e=0.5):
    c_ = int(c2 * e)
    c1p = _round_up(c1, LANE)
    chp = _round_up(c_, LANE)
    c2p = _round_up(c2, LANE)

    # cv1: Conv(c1, c_, 1) = conv + BN + SiLU
    s1, sh1 = _bn_scale_shift(EPS_CONV, c_)
    w1 = _pad2(_fold_1x1(raw["cv1_w"], s1), c1p, chp).astype(jnp.bfloat16)
    b1 = _pad_bias(sh1, chp)

    # self.bn (over cat([y1, y2])) folded into cv3 (y1 half) / cv2 (y2 half).
    sbn, shbn = _bn_scale_shift(EPS_BN, 2 * c_)
    w3 = _pad2(_fold_1x1(raw["cv3_w"], sbn[:c_]), chp, chp).astype(jnp.bfloat16)
    bbn1 = _pad_bias(shbn[:c_], chp)
    w2 = _pad2(_fold_1x1(raw["cv2_w"], sbn[c_:]), c1p, chp).astype(jnp.bfloat16)
    bbn2 = _pad_bias(shbn[c_:], chp)

    # cv4: Conv(2c_, c2, 1) = conv + BN + SiLU, split into y1/y2 halves of the concat.
    s4, sh4 = _bn_scale_shift(EPS_CONV, c2)
    w4 = _fold_1x1(raw["cv4_w"], s4)                  # (2c_, c2)
    w4a = _pad2(w4[:c_], chp, c2p).astype(jnp.bfloat16)
    w4b = _pad2(w4[c_:], chp, c2p).astype(jnp.bfloat16)
    b4 = _pad_bias(sh4, c2p)

    m = []
    for wa_raw, wb_raw in raw["m"]:
        wa, ba = _fold_3x3(wa_raw, EPS_CONV, chp)
        wb, bb = _fold_3x3(wb_raw, EPS_CONV, chp)
        m.append((wa, ba, wb, bb))

    return dict(c_=c_, c2=c2, c1p=c1p, chp=chp, c2p=c2p,
                w1=w1, b1=b1, w2=w2, bbn2=bbn2, w3=w3, bbn1=bbn1,
                w4a=w4a, w4b=w4b, b4=b4, m=m)


# ----------------------------- forward pass -----------------------------

def bottleneck_csp_forward(x_nchw, p):
    n, c1, h, w = x_nchw.shape
    c2 = p["c2"]
    c1p, chp, c2p = p["c1p"], p["chp"], p["c2p"]
    m_rows = n * h * w

    # NCHW -> NHWC, zero-pad channels to a lane multiple, flatten rows, cast to bf16
    # (the kernels use bf16 MXU operands anyway; halves HBM traffic for x, read twice).
    x_nhwc = jnp.transpose(x_nchw, (0, 2, 3, 1))
    x2d = jnp.pad(x_nhwc, ((0, 0), (0, 0), (0, 0), (0, c1p - c1)))
    x2d = x2d.reshape(m_rows, c1p).astype(jnp.bfloat16)

    # cv1 (1x1 conv + BN + SiLU).
    y2d = _row_blocked_call(
        _conv1x1_bias_silu_kernel, [x2d], [p["w1"], p["b1"]],
        out_cols=chp, out_dtype=jnp.bfloat16, M=m_rows,
        flops=2 * m_rows * c1p * chp, transcendentals=m_rows * chp)
    z = y2d.reshape(n, h, w, chp)

    # m: Bottleneck blocks (two 3x3 Conv+BN+SiLU; residual fused into the second).
    for wa, ba, wb, bb in p["m"]:
        t = _conv3x3_bn_silu(z, wa, ba)
        z = _conv3x3_bn_silu(t, wb, bb, residual=z)

    # Fused tail: y1 = bn(cv3(z)); y2 = bn(cv2(x)); out = cv4(SiLU(cat(y1, y2))).
    out2d = _row_blocked_call(
        _csp_tail_kernel, [z.reshape(m_rows, chp), x2d],
        [p["w3"], p["bbn1"], p["w2"], p["bbn2"], p["w4a"], p["w4b"], p["b4"]],
        out_cols=c2p, out_dtype=jnp.float32, M=m_rows,
        flops=2 * m_rows * (chp * chp + c1p * chp + 2 * chp * c2p),
        transcendentals=m_rows * (2 * chp + c2p))

    out = out2d[:, :c2].reshape(n, h, w, c2)
    return jnp.transpose(out, (0, 3, 1, 2))


# ----------------------------- pure-JAX reference -----------------------------

def ref_forward(x, raw):
    def conv(v, w, pad):
        return lax.conv_general_dilated(
            v, w, (1, 1), [(pad, pad), (pad, pad)],
            dimension_numbers=("NCHW", "OIHW", "NCHW"))

    def bn(v, eps):  # fresh-init BN stats
        return v / jnp.sqrt(1.0 + eps)

    def conv_bn_silu(v, w, pad):
        y = bn(conv(v, w, pad), EPS_CONV)
        return y * jax.nn.sigmoid(y)

    y = conv_bn_silu(x, raw["cv1_w"], 0)
    for wa, wb in raw["m"]:
        t = conv_bn_silu(y, wa, 1)
        y = y + conv_bn_silu(t, wb, 1)
    y1 = conv(y, raw["cv3_w"], 0)
    y2 = conv(x, raw["cv2_w"], 0)
    hcat = bn(jnp.concatenate([y1, y2], axis=1), EPS_BN)
    hcat = hcat * jax.nn.sigmoid(hcat)
    return conv_bn_silu(hcat, raw["cv4_w"], 0)


if __name__ == "__main__":
    key = jax.random.PRNGKey(0)
    k_x, k_p = jax.random.split(key)

    N, C1, C2, H, W, NBLK = 2, 4, 8, 16, 16, 1
    x = jax.random.normal(k_x, (N, C1, H, W), jnp.float32)

    raw = make_raw_params(k_p, C1, C2, NBLK)
    params = prepare_kernel_params(raw, C1, C2)

    out = jax.block_until_ready(bottleneck_csp_forward(x, params))
    assert out.shape == (N, C2, H, W), out.shape

    ref = jax.block_until_ready(ref_forward(x, raw))
    err = float(jnp.max(jnp.abs(out.astype(jnp.float32) - ref)))
    # bf16 dot operands / bf16 intermediate activations vs a full-f32 reference.
    assert err < 3e-2, f"max abs err {err}"

    print("KERNEL_OK")
</pallas_src>

<mosaic_0001>
module attributes {stable_mosaic.version = 11 : i64} {
  func.func @_conv1x1_bias_silu_kernel(%arg0: i32, %arg1: memref<512x128xbf16, #tpu.memory_space<vmem>>, %arg2: memref<128x128xbf16, #tpu.memory_space<vmem>>, %arg3: memref<1x128xf32, #tpu.memory_space<vmem>>, %arg4: memref<512x128xbf16, #tpu.memory_space<vmem>>) attributes {dimension_semantics = [#tpu.dimension_semantics<parallel>], iteration_bounds = array<i64: 1>, scalar_prefetch = 0 : i64, scratch_operands = 0 : i64, tpu.core_type = #tpu.core_type<tc>, window_params = [{transform_indices = @transform_0, window_bounds = array<i64: 512, 128>}, {pipeline_mode = #tpu.pipeline_mode<synchronous>, transform_indices = @transform_1, window_bounds = array<i64: 128, 128>}, {pipeline_mode = #tpu.pipeline_mode<synchronous>, transform_indices = @transform_2, window_bounds = array<i64: 1, 128>}, {transform_indices = @transform_3, window_bounds = array<i64: 512, 128>}]} {
    %c0 = arith.constant 0 : index
    %c0_0 = arith.constant 0 : index
    %0 = vector.load %arg1[%c0, %c0_0] : memref<512x128xbf16, #tpu.memory_space<vmem>>, vector<512x128xbf16>
    %c0_1 = arith.constant 0 : index
    %c0_2 = arith.constant 0 : index
    %1 = vector.load %arg2[%c0_1, %c0_2] : memref<128x128xbf16, #tpu.memory_space<vmem>>, vector<128x128xbf16>
    %cst = arith.constant dense<0.000000e+00> : vector<512x128xf32>
    %2 = tpu.matmul %0, %1, %cst {dimension_numbers = #tpu.dot_dimension_numbers<[1], [0], [0], [1], [0, 0, 1, 1], [], []>} : vector<512x128xbf16>, vector<128x128xbf16>, vector<512x128xf32> -> vector<512x128xf32>
    %c0_3 = arith.constant 0 : index
    %c0_4 = arith.constant 0 : index
    %3 = vector.load %arg3[%c0_3, %c0_4] : memref<1x128xf32, #tpu.memory_space<vmem>>, vector<1x128xf32>
    %4 = vector.broadcast %3 : vector<1x128xf32> to vector<512x128xf32>
    %5 = arith.addf %2, %4 : vector<512x128xf32>
    %6 = arith.negf %5 : vector<512x128xf32>
    %7 = math.exp %6 : vector<512x128xf32>
    %cst_5 = arith.constant 1.000000e+00 : f32
    %8 = vector.broadcast %cst_5 : f32 to vector<512x128xf32>
    %9 = arith.addf %8, %7 : vector<512x128xf32>
    %10 = arith.divf %8, %9 : vector<512x128xf32>
    %11 = arith.mulf %5, %10 : vector<512x128xf32>
    %12 = arith.truncf %11 : vector<512x128xf32> to vector<512x128xbf16>
    %c0_6 = arith.constant 0 : index
    %c0_7 = arith.constant 0 : index
    %13 = vector.load %arg4[%c0_6, %c0_7] : memref<512x128xbf16, #tpu.memory_space<vmem>>, vector<512x128xbf16>
    tpu.vector_store %arg4[%c0_6, %c0_7], %12 {strides = array<i32>} : memref<512x128xbf16, #tpu.memory_space<vmem>>, vector<512x128xbf16>,
    return
  }
  func.func @transform_0(%arg0: i32) -> (i32, i32) {
    %c0_i32 = arith.constant 0 : i32
    %c0_i32_0 = arith.constant 0 : i32
    return %arg0, %c0_i32 : i32, i32
  }
  func.func @transform_1(%arg0: i32) -> (i32, i32) {
    %c0_i32 = arith.constant 0 : i32
    %c0_i32_0 = arith.constant 0 : i32
    %c0_i32_1 = arith.constant 0 : i32
    return %c0_i32, %c0_i32_0 : i32, i32
  }
  func.func @transform_2(%arg0: i32) -> (i32, i32) {
    %c0_i32 = arith.constant 0 : i32
    %c0_i32_0 = arith.constant 0 : i32
    %c0_i32_1 = arith.constant 0 : i32
    return %c0_i32, %c0_i32_0 : i32, i32
  }
  func.func @transform_3(%arg0: i32) -> (i32, i32) {
    %c0_i32 = arith.constant 0 : i32
    %c0_i32_0 = arith.constant 0 : i32
    return %arg0, %c0_i32 : i32, i32
  }
}

</mosaic_0001>

<llo_original>
// kernel: tpu_custom_call.1
$region0: #{tpu_custom_call.1}
  #allocation0 [shape = 'u32[]', space=smem, size = 0x4, offset = 0x4, fixed_abs, tag = 'smem constant byte address 0x4 - core index']
  #allocation1 [shape = 'u32[144,128]{1,0:T(1,128)}', space=vmem, size = 0x12000, scoped, tag = 'internal scratch']
  %s0 = inlined_call_operand.hbm [shape: bf16[512,128], index: 0, kind: input, shape index: {}]
  %s1 = inlined_call_operand.hbm [shape: bf16[128,128], index: 1, kind: input, shape index: {}]
  %s2 = inlined_call_operand.vmem [shape: f32[1,128], index: 2, kind: input, shape index: {}]
  %s3 = inlined_call_operand.hbm [shape: bf16[512,128], index: 3, kind: output, shape index: {}]
  %s4 = sld [smem:[#allocation0]]
  $region30: #{tpu_custom_call.1} parent=0
    _
  %s6 = ssub.s32 1, %s4
  %s7 = scalar_select 0, %s6, %s4
  $region1: #{tpu_custom_call.1} parent=0
    #allocation2 [shape = 'u8[131072]{0}', space=vmem, size = 0x20000, scoped, tag = 'input window, operand 0, single buffered']
    #allocation3 [shape = 's32[1]{0}', space=sflag, size = 0x4, scoped, tag = 'scoped memory for tpu_custom_call.1']
    #allocation4 [shape = 's32[1]{0}', space=sflag, size = 0x4, scoped, tag = 'scoped memory for tpu_custom_call.1']
    #allocation5 [shape = 'u8[32768]{0}', space=vmem, size = 0x8000, scoped, tag = 'input window, operand 1, single buffered']
    #allocation6 [shape = 's32[1]{0}', space=sflag, size = 0x4, scoped, tag = 'scoped memory for tpu_custom_call.1']
    #allocation7 [shape = 'u8[131072]{0}', space=vmem, size = 0x20000, scoped, tag = 'output window, operand 0, single buffered']
    %8 = vsyncpa [#allocation3], 0
    %9 = vsyncpa [#allocation6], 0
    %10 = vsyncpa [#allocation4], 0
    // Predicated region
    $region2: #{tpu_custom_call.1} parent=1 // pred_check
      _
    $region3: #{tpu_custom_call.1} parent=1 // pred_check_branch
      %12 = sbr.rel (0) target = $region5
    $region4: #{tpu_custom_call.1} parent=1 // pred_region
      %s14 = ssub.s32 4096, 4096
      %15 = vsyncadd [#allocation3], %s14
      %s16 = sshll.u32 [#allocation2], 4
      %s17 = int_to_ptr.vmem [resolvable:$true] %s16
      %22 = dma.hbm_to_vmem [thread:$0]  %s0, 4096, %s17, [#allocation3], 64, 64, 4
    $region5: #{tpu_custom_call.1} parent=1 // pred_fallthru
      _
    // Predicated region
    $region6: #{tpu_custom_call.1} parent=1 // pred_check
      _
    $region7: #{tpu_custom_call.1} parent=1 // pred_check_branch
      %24 = sbr.rel (0) target = $region9
    $region8: #{tpu_custom_call.1} parent=1 // pred_region
      %s26 = ssub.s32 1024, 1024
      %27 = vsyncadd [#allocation6], %s26
      %s28 = sshll.u32 [#allocation5], 4
      %s29 = int_to_ptr.vmem [resolvable:$true] %s28
      %34 = dma.hbm_to_vmem [thread:$0]  %s1, 1024, %s29, [#allocation6], 64, 64, 4
    $region9: #{tpu_custom_call.1} parent=1 // pred_fallthru
      _
    // Predicated region
    $region10: #{tpu_custom_call.1} parent=1 // pred_check
      _
    $region11: #{tpu_custom_call.1} parent=1 // pred_check_branch
      %36 = sbr.rel (0) target = $region13
    $region12: #{tpu_custom_call.1} parent=1 // pred_region
      _
    $region13: #{tpu_custom_call.1} parent=1 // pred_fallthru
      _
    // Predicated region
    $region14: #{tpu_custom_call.1} parent=1 // pred_check
      _
    $region15: #{tpu_custom_call.1} parent=1 // pred_check_branch
      %38 = sbr.rel (0) target = $region17
    $region16: #{tpu_custom_call.1} parent=1 // pred_region
      %39 = dma.done [#allocation3], 4096
    $region17: #{tpu_custom_call.1} parent=1 // pred_fallthru
      _
    // Predicated region
    $region18: #{tpu_custom_call.1} parent=1 // pred_check
      _
    $region19: #{tpu_custom_call.1} parent=1 // pred_check_branch
      %41 = sbr.rel (0) target = $region21
    $region20: #{tpu_custom_call.1} parent=1 // pred_region
      %42 = dma.done [#allocation6], 1024
    $region21: #{tpu_custom_call.1} parent=1 // pred_fallthru
      _
    %v44 = vld [vmem:[#allocation2] sm:$0xf]
    %v45 = vld [vmem:[#allocation2 + $0x4] sm:$0xf]
    %v46 = vld [vmem:[#allocation2 + $0x8] sm:$0xf]
    %v47 = vld [vmem:[#allocation2 + $0xc] sm:$0xf]
    %v48 = vld [vmem:[#allocation2 + $0x10] sm:$0xf]
    %v49 = vld [vmem:[#allocation2 + $0x14] sm:$0xf]
    %v50 = vld [vmem:[#allocation2 + $0x18] sm:$0xf]
    %v51 = vld [vmem:[#allocation2 + $0x1c] sm:$0xf]
    %v52 = vld [vmem:[#allocation2 + $0x20] sm:$0xf]
    %v53 = vld [vmem:[#allocation2 + $0x24] sm:$0xf]
    %v54 = vld [vmem:[#allocation2 + $0x28] sm:$0xf]
    %v55 = vld [vmem:[#allocation2 + $0x2c] sm:$0xf]
    %v56 = vld [vmem:[#allocation2 + $0x30] sm:$0xf]
    %v57 = vld [vmem:[#allocation2 + $0x34] sm:$0xf]
    %v58 = vld [vmem:[#allocation2 + $0x38] sm:$0xf]
    %v59 = vld [vmem:[#allocation2 + $0x3c] sm:$0xf]
    %v60 = vld [vmem:[#allocation2 + $0x40] sm:$0xf]
    %v61 = vld [vmem:[#allocation2 + $0x44] sm:$0xf]
    %v62 = vld [vmem:[#allocation2 + $0x48] sm:$0xf]
    %v63 = vld [vmem:[#allocation2 + $0x4c] sm:$0xf]
    %v64 = vld [vmem:[#allocation2 + $0x50] sm:$0xf]
    %v65 = vld [vmem:[#allocation2 + $0x54] sm:$0xf]
    %v66 = vld [vmem:[#allocation2 + $0x58] sm:$0xf]
    %v67 = vld [vmem:[#allocation2 + $0x5c] sm:$0xf]
    %v68 = vld [vmem:[#allocation2 + $0x60] sm:$0xf]
    %v69 = vld [vmem:[#allocation2 + $0x64] sm:$0xf]
    %v70 = vld [vmem:[#allocation2 + $0x68] sm:$0xf]
    %v71 = vld [vmem:[#allocation2 + $0x6c] sm:$0xf]
    %v72 = vld [vmem:[#allocation2 + $0x70] sm:$0xf]
    %v73 = vld [vmem:[#allocation2 + $0x74] sm:$0xf]
    %v74 = vld [vmem:[#allocation2 + $0x78] sm:$0xf]
    %v75 = vld [vmem:[#allocation2 + $0x7c] sm:$0xf]
    %v76 = vld [vmem:[#allocation2 + $0x80] sm:$0xf]
    %v77 = vld [vmem:[#allocation2 + $0x84] sm:$0xf]
    %v78 = vld [vmem:[#allocation2 + $0x88] sm:$0xf]
    %v79 = vld [vmem:[#allocation2 + $0x8c] sm:$0xf]
    %v80 = vld [vmem:[#allocation2 + $0x90] sm:$0xf]
    %v81 = vld [vmem:[#allocation2 + $0x94] sm:$0xf]
    %v82 = vld [vmem:[#allocation2 + $0x98] sm:$0xf]
    %v83 = vld [vmem:[#allocation2 + $0x9c] sm:$0xf]
    %v84 = vld [vmem:[#allocation2 + $0xa0] sm:$0xf]
    %v85 = vld [vmem:[#allocation2 + $0xa4] sm:$0xf]
    %v86 = vld [vmem:[#allocation2 + $0xa8] sm:$0xf]
    %v87 = vld [vmem:[#allocation2 + $0xac] sm:$0xf]
    %v88 = vld [vmem:[#allocation2 + $0xb0] sm:$0xf]
    %v89 = vld [vmem:[#allocation2 + $0xb4] sm:$0xf]
    %v90 = vld [vmem:[#allocation2 + $0xb8] sm:$0xf]
    %v91 = vld [vmem:[#allocation2 + $0xbc] sm:$0xf]
    %v92 = vld [vmem:[#allocation2 + $0xc0] sm:$0xf]
    %v93 = vld [vmem:[#allocation2 + $0xc4] sm:$0xf]
    %v94 = vld [vmem:[#allocation2 + $0xc8] sm:$0xf]
    %v95 = vld [vmem:[#allocation2 + $0xcc] sm:$0xf]
    %v96 = vld [vmem:[#allocation2 + $0xd0] sm:$0xf]
    %v97 = vld [vmem:[#allocation2 + $0xd4] sm:$0xf]
    %v98 = vld [vmem:[#allocation2 + $0xd8] sm:$0xf]
    %v99 = vld [vmem:[#allocation2 + $0xdc] sm:$0xf]
    %v100 = vld [vmem:[#allocation2 + $0xe0] sm:$0xf]
    %v101 = vld [vmem:[#allocation2 + $0xe4] sm:$0xf]
    %v102 = vld [vmem:[#allocation2 + $0xe8] sm:$0xf]
    %v103 = vld [vmem:[#allocation2 + $0xec] sm:$0xf]
    %v104 = vld [vmem:[#allocation2 + $0xf0] sm:$0xf]
    %v105 = vld [vmem:[#allocation2 + $0xf4] sm:$0xf]
    %v106 = vld [vmem:[#allocation2 + $0xf8] sm:$0xf]
    %v107 = vld [vmem:[#allocation2 + $0xfc] sm:$0xf]
    %v108 = vld [vmem:[#allocation5] sm:$0xf]
    %v109 = vld [vmem:[#allocation5 + $0x4] sm:$0xf]
    %v110 = vld [vmem:[#allocation5 + $0x8] sm:$0xf]
    %v111 = vld [vmem:[#allocation5 + $0xc] sm:$0xf]
    %v112 = vld [vmem:[#allocation5 + $0x10] sm:$0xf]
    %v113 = vld [vmem:[#allocation5 + $0x14] sm:$0xf]
    %v114 = vld [vmem:[#allocation5 + $0x18] sm:$0xf]
    %v115 = vld [vmem:[#allocation5 + $0x1c] sm:$0xf]
    %v116 = vld [vmem:[#allocation5 + $0x20] sm:$0xf]
    %v117 = vld [vmem:[#allocation5 + $0x24] sm:$0xf]
    %v118 = vld [vmem:[#allocation5 + $0x28] sm:$0xf]
    %v119 = vld [vmem:[#allocation5 + $0x2c] sm:$0xf]
    %v120 = vld [vmem:[#allocation5 + $0x30] sm:$0xf]
    %v121 = vld [vmem:[#allocation5 + $0x34] sm:$0xf]
    %v122 = vld [vmem:[#allocation5 + $0x38] sm:$0xf]
    %v123 = vld [vmem:[#allocation5 + $0x3c] sm:$0xf]
    %v124 = vld [vmem:[%s2] sm:$0x1]
    %v126 = vlaneseq
    %v127 = vshrl.u32 %v126, 7
    %v128 = vsub.s32 0, %v127
    %v129 = vrot.slane %v124, %v128
    %v195 = vunpack.c.l.b16 %v44
    %v196 = vunpack.c.l.b16 %v45
    %v197 = vunpack.c.l.b16 %v46
    %v198 = vunpack.c.l.b16 %v47
    %v199 = vunpack.c.l.b16 %v48
    %v200 = vunpack.c.l.b16 %v49
    %v201 = vunpack.c.l.b16 %v50
    %v202 = vunpack.c.l.b16 %v51
    %v203 = vunpack.c.l.b16 %v52
    %v204 = vunpack.c.l.b16 %v53
    %v205 = vunpack.c.l.b16 %v54
    %v206 = vunpack.c.l.b16 %v55
    %v207 = vunpack.c.l.b16 %v56
    %v208 = vunpack.c.l.b16 %v57
    %v209 = vunpack.c.l.b16 %v58
    %v210 = vunpack.c.l.b16 %v59
    %v211 = vunpack.c.l.b16 %v60
    %v212 = vunpack.c.l.b16 %v61
    %v213 = vunpack.c.l.b16 %v62
    %v214 = vunpack.c.l.b16 %v63
    %v215 = vunpack.c.l.b16 %v64
    %v216 = vunpack.c.l.b16 %v65
    %v217 = vunpack.c.l.b16 %v66
    %v218 = vunpack.c.l.b16 %v67
    %v219 = vunpack.c.l.b16 %v68
    %v220 = vunpack.c.l.b16 %v69
    %v221 = vunpack.c.l.b16 %v70
    %v222 = vunpack.c.l.b16 %v71
    %v223 = vunpack.c.l.b16 %v72
    %v224 = vunpack.c.l.b16 %v73
    %v225 = vunpack.c.l.b16 %v74
    %v226 = vunpack.c.l.b16 %v75
    %v227 = vunpack.c.l.b16 %v76
    %v228 = vunpack.c.l.b16 %v77
    %v229 = vunpack.c.l.b16 %v78
    %v230 = vunpack.c.l.b16 %v79
    %v231 = vunpack.c.l.b16 %v80
    %v232 = vunpack.c.l.b16 %v81
    %v233 = vunpack.c.l.b16 %v82
    %v234 = vunpack.c.l.b16 %v83
    %v235 = vunpack.c.l.b16 %v84
    %v236 = vunpack.c.l.b16 %v85
    %v237 = vunpack.c.l.b16 %v86
    %v238 = vunpack.c.l.b16 %v87
    %v239 = vunpack.c.l.b16 %v88
    %v240 = vunpack.c.l.b16 %v89
    %v241 = vunpack.c.l.b16 %v90
    %v242 = vunpack.c.l.b16 %v91
    %v243 = vunpack.c.l.b16 %v92
    %v244 = vunpack.c.l.b16 %v93
    %v245 = vunpack.c.l.b16 %v94
    %v246 = vunpack.c.l.b16 %v95
    %v247 = vunpack.c.l.b16 %v96
    %v248 = vunpack.c.l.b16 %v97
    %v249 = vunpack.c.l.b16 %v98
    %v250 = vunpack.c.l.b16 %v99
    %v251 = vunpack.c.l.b16 %v100
    %v252 = vunpack.c.l.b16 %v101
    %v253 = vunpack.c.l.b16 %v102
    %v254 = vunpack.c.l.b16 %v103
    %v255 = vunpack.c.l.b16 %v104
    %v256 = vunpack.c.l.b16 %v105
    %v257 = vunpack.c.l.b16 %v106
    %v258 = vunpack.c.l.b16 %v107
    %v259 = vpack.c.b16 %v196, %v195
    %v260 = vpack.c.b16 %v198, %v197
    %v261 = vpack.c.b16 %v200, %v199
    %v262 = vpack.c.b16 %v202, %v201
    %v263 = vpack.c.b16 %v204, %v203
    %v264 = vpack.c.b16 %v206, %v205
    %v265 = vpack.c.b16 %v208, %v207
    %v266 = vpack.c.b16 %v210, %v209
    %v267 = vpack.c.b16 %v212, %v211
    %v268 = vpack.c.b16 %v214, %v213
    %v269 = vpack.c.b16 %v216, %v215
    %v270 = vpack.c.b16 %v218, %v217
    %v271 = vpack.c.b16 %v220, %v219
    %v272 = vpack.c.b16 %v222, %v221
    %v273 = vpack.c.b16 %v224, %v223
    %v274 = vpack.c.b16 %v226, %v225
    %v275 = vpack.c.b16 %v228, %v227
    %v276 = vpack.c.b16 %v230, %v229
    %v277 = vpack.c.b16 %v232, %v231
    %v278 = vpack.c.b16 %v234, %v233
    %v279 = vpack.c.b16 %v236, %v235
    %v280 = vpack.c.b16 %v238, %v237
    %v281 = vpack.c.b16 %v240, %v239
    %v282 = vpack.c.b16 %v242, %v241
    %v283 = vpack.c.b16 %v244, %v243
    %v284 = vpack.c.b16 %v246, %v245
    %v285 = vpack.c.b16 %v248, %v247
    %v286 = vpack.c.b16 %v250, %v249
    %v287 = vpack.c.b16 %v252, %v251
    %v288 = vpack.c.b16 %v254, %v253
    %v289 = vpack.c.b16 %v256, %v255
    %v290 = vpack.c.b16 %v258, %v257
    %v339 = vunpack.c.l.b16 %v108
    %v340 = vunpack.c.l.b16 %v109
    %v341 = vunpack.c.l.b16 %v110
    %v342 = vunpack.c.l.b16 %v111
    %v343 = vunpack.c.l.b16 %v112
    %v344 = vunpack.c.l.b16 %v113
    %v345 = vunpack.c.l.b16 %v114
    %v346 = vunpack.c.l.b16 %v115
    %v347 = vunpack.c.l.b16 %v116
    %v348 = vunpack.c.l.b16 %v117
    %v349 = vunpack.c.l.b16 %v118
    %v350 = vunpack.c.l.b16 %v119
    %v351 = vunpack.c.l.b16 %v120
    %v352 = vunpack.c.l.b16 %v121
    %v353 = vunpack.c.l.b16 %v122
    %v354 = vunpack.c.l.b16 %v123
    %v355 = vpack.c.b16 %v340, %v339
    %v356 = vpack.c.b16 %v342, %v341
    %v357 = vpack.c.b16 %v344, %v343
    %v358 = vpack.c.b16 %v346, %v345
    %v359 = vpack.c.b16 %v348, %v347
    %v360 = vpack.c.b16 %v350, %v349
    %v361 = vpack.c.b16 %v352, %v351
    %v362 = vpack.c.b16 %v354, %v353
    %371 = vmatprep.subr.bf16.mxu0 0
    %372 = vmatpush1.bf16.msra.mxu0 %v355
    %373 = vmatprep.subr.bf16.mxu0 0
    %374 = vmatpush1.bf16.msra.mxu0 %v356
    %375 = vmatprep.subr.bf16.mxu0 0
    %376 = vmatpush1.bf16.msra.mxu0 %v357
    %377 = vmatprep.subr.bf16.mxu0 0
    %378 = vmatpush1.bf16.msra.mxu0 %v358
    %379 = vmatprep.subr.bf16.mxu0 0
    %380 = vmatpush1.bf16.msra.mxu0 %v359
    %381 = vmatprep.subr.bf16.mxu0 0
    %382 = vmatpush1.bf16.msra.mxu0 %v360
    %383 = vmatprep.subr.bf16.mxu0 0
    %384 = vmatpush1.bf16.msra.mxu0 %v361
    %385 = vmatprep.subr.bf16.mxu0 0
    %386 = vmatpush1.bf16.msra.mxu0 %v362
    %387 = vmatprep.subr.bf16.mxu0 0
    %388 = vmatpush1.bf16.msra.mxu0 0
    %389 = vmatprep.subr.bf16.mxu0 0
    %390 = vmatpush1.bf16.msra.mxu0 0
    %391 = vmatprep.subr.bf16.mxu0 0
    %392 = vmatpush1.bf16.msra.mxu0 0
    %393 = vmatprep.subr.bf16.mxu0 0
    %394 = vmatpush1.bf16.msra.mxu0 0
    %395 = vmatprep.subr.bf16.mxu0 0
    %396 = vmatpush1.bf16.msra.mxu0 0
    %397 = vmatprep.subr.bf16.mxu0 0
    %398 = vmatpush1.bf16.msra.mxu0 0
    %399 = vmatprep.subr.bf16.mxu0 0
    %400 = vmatpush1.bf16.msra.mxu0 0
    %401 = vmatprep.subr.bf16.mxu0 0
    %402 = vmatpush1.bf16.msra.mxu0 0
    %403 = vmatprep.mubr.bf16.mxu0 0
    %404 = vmatmul.mubr.bf16.gmra.mrb[0].mxu0 %v259
    %v405 = vpop.f32.mrb[0].mxu0
    %v406 = vadd.f32 %v129, %v405
    %v407 = vpop.f32.mrb[0].mxu0
    %v408 = vpop.f32.mrb[0].mxu0
    %v409 = vadd.f32 %v129, %v408
    %v410 = vpop.f32.mrb[0].mxu0
    %411 = vmatprep.mubr.bf16.mxu0 0
    %412 = vmatmul.mubr.bf16.gmra.mrb[0].mxu0 %v260
    %v413 = vpop.f32.mrb[0].mxu0
    %v414 = vadd.f32 %v129, %v413
    %v415 = vpop.f32.mrb[0].mxu0
    %v416 = vpop.f32.mrb[0].mxu0
    %v417 = vadd.f32 %v129, %v416
    %v418 = vpop.f32.mrb[0].mxu0
    %419 = vmatprep.mubr.bf16.mxu0 0
    %420 = vmatmul.mubr.bf16.gmra.mrb[0].mxu0 %v261
    %v421 = vpop.f32.mrb[0].mxu0
    %v422 = vadd.f32 %v129, %v421
    %v423 = vpop.f32.mrb[0].mxu0
    %v424 = vpop.f32.mrb[0].mxu0
    %v425 = vadd.f32 %v129, %v424
    %v426 = vpop.f32.mrb[0].mxu0
    %427 = vmatprep.mubr.bf16.mxu0 0
    %428 = vmatmul.mubr.bf16.gmra.mrb[0].mxu0 %v262
    %v429 = vpop.f32.mrb[0].mxu0
    %v430 = vadd.f32 %v129, %v429
    %v431 = vpop.f32.mrb[0].mxu0
    %v432 = vpop.f32.mrb[0].mxu0
    %v433 = vadd.f32 %v129, %v432
    %v434 = vpop.f32.mrb[0].mxu0
    %435 = vmatprep.mubr.bf16.mxu0 0
    %436 = vmatmul.mubr.bf16.gmra.mrb[0].mxu0 %v263
    %v437 = vpop.f32.mrb[0].mxu0
    %v438 = vadd.f32 %v129, %v437
    %v439 = vpop.f32.mrb[0].mxu0
    %v440 = vpop.f32.mrb[0].mxu0
    %v441 = vadd.f32 %v129, %v440
    %v442 = vpop.f32.mrb[0].mxu0
    %443 = vmatprep.mubr.bf16.mxu0 0
    %444 = vmatmul.mubr.bf16.gmra.mrb[0].mxu0 %v264
    %v445 = vpop.f32.mrb[0].mxu0
    %v446 = vadd.f32 %v129, %v445
    %v447 = vpop.f32.mrb[0].mxu0
    %v448 = vpop.f32.mrb[0].mxu0
    %v449 = vadd.f32 %v129, %v448
    %v450 = vpop.f32.mrb[0].mxu0
    %451 = vmatprep.mubr.bf16.mxu0 0
    %452 = vmatmul.mubr.bf16.gmra.mrb[0].mxu0 %v265
    %v453 = vpop.f32.mrb[0].mxu0
    %v454 = vadd.f32 %v129, %v453
    %v455 = vpop.f32.mrb[0].mxu0
    %v456 = vpop.f32.mrb[0].mxu0
    %v457 = vadd.f32 %v129, %v456
    %v458 = vpop.f32.mrb[0].mxu0
    %459 = vmatprep.mubr.bf16.mxu0 0
    %460 = vmatmul.mubr.bf16.gmra.mrb[0].mxu0 %v266
    %v461 = vpop.f32.mrb[0].mxu0
    %v462 = vadd.f32 %v129, %v461
    %v463 = vpop.f32.mrb[0].mxu0
    %v464 = vpop.f32.mrb[0].mxu0
    %v465 = vadd.f32 %v129, %v464
    %v466 = vpop.f32.mrb[0].mxu0
    %467 = vmatprep.mubr.bf16.mxu0 0
    %468 = vmatmul.mubr.bf16.gmra.mrb[0].mxu0 %v267
    %v469 = vpop.f32.mrb[0].mxu0
    %v470 = vadd.f32 %v129, %v469
    %v471 = vpop.f32.mrb[0].mxu0
    %v472 = vpop.f32.mrb[0].mxu0
    %v473 = vadd.f32 %v129, %v472
    %v474 = vpop.f32.mrb[0].mxu0
    %475 = vmatprep.mubr.bf16.mxu0 0
    %476 = vmatmul.mubr.bf16.gmra.mrb[0].mxu0 %v268
    %v477 = vpop.f32.mrb[0].mxu0
    %v478 = vadd.f32 %v129, %v477
    %v479 = vpop.f32.mrb[0].mxu0
    %v480 = vpop.f32.mrb[0].mxu0
    %v481 = vadd.f32 %v129, %v480
    %v482 = vpop.f32.mrb[0].mxu0
    %483 = vmatprep.mubr.bf16.mxu0 0
    %484 = vmatmul.mubr.bf16.gmra.mrb[0].mxu0 %v269
    %v485 = vpop.f32.mrb[0].mxu0
    %v486 = vadd.f32 %v129, %v485
    %v487 = vpop.f32.mrb[0].mxu0
    %v488 = vpop.f32.mrb[0].mxu0
    %v489 = vadd.f32 %v129, %v488
    %v490 = vpop.f32.mrb[0].mxu0
    %491 = vmatprep.mubr.bf16.mxu0 0
    %492 = vmatmul.mubr.bf16.gmra.mrb[0].mxu0 %v270
    %v493 = vpop.f32.mrb[0].mxu0
    %v494 = vadd.f32 %v129, %v493
    %v495 = vpop.f32.mrb[0].mxu0
    %v496 = vpop.f32.mrb[0].mxu0
    %v497 = vadd.f32 %v129, %v496
    %v498 = vpop.f32.mrb[0].mxu0
    %499 = vmatprep.mubr.bf16.mxu0 0
    %500 = vmatmul.mubr.bf16.gmra.mrb[0].mxu0 %v271
    %v501 = vpop.f32.mrb[0].mxu0
    %v502 = vadd.f32 %v129, %v501
    %v503 = vpop.f32.mrb[0].mxu0
    %v504 = vpop.f32.mrb[0].mxu0
    %v505 = vadd.f32 %v129, %v504
    %v506 = vpop.f32.mrb[0].mxu0
    %507 = vmatprep.mubr.bf16.mxu0 0
    %508 = vmatmul.mubr.bf16.gmra.mrb[0].mxu0 %v272
    %v509 = vpop.f32.mrb[0].mxu0
    %v510 = vadd.f32 %v129, %v509
    %v511 = vpop.f32.mrb[0].mxu0
    %v512 = vpop.f32.mrb[0].mxu0
    %v513 = vadd.f32 %v129, %v512
    %v514 = vpop.f32.mrb[0].mxu0
    %515 = vmatprep.mubr.bf16.mxu0 0
    %516 = vmatmul.mubr.bf16.gmra.mrb[0].mxu0 %v273
    %v517 = vpop.f32.mrb[0].mxu0
    %v518 = vadd.f32 %v129, %v517
    %v519 = vpop.f32.mrb[0].mxu0
    %v520 = vpop.f32.mrb[0].mxu0
    %v521 = vadd.f32 %v129, %v520
    %v522 = vpop.f32.mrb[0].mxu0
    %523 = vmatprep.mubr.bf16.mxu0 0
    %524 = vmatmul.mubr.bf16.gmra.mrb[0].mxu0 %v274
    %v525 = vpop.f32.mrb[0].mxu0
    %v526 = vadd.f32 %v129, %v525
    %v527 = vpop.f32.mrb[0].mxu0
    %v528 = vpop.f32.mrb[0].mxu0
    %v529 = vadd.f32 %v129, %v528
    %v530 = vpop.f32.mrb[0].mxu0
    %531 = vmatprep.mubr.bf16.mxu0 0
    %532 = vmatmul.mubr.bf16.gmra.mrb[0].mxu0 %v275
    %v533 = vpop.f32.mrb[0].mxu0
    %v534 = vadd.f32 %v129, %v533
    %v535 = vpop.f32.mrb[0].mxu0
    %v536 = vpop.f32.mrb[0].mxu0
    %v537 = vadd.f32 %v129, %v536
    %v538 = vpop.f32.mrb[0].mxu0
    %539 = vmatprep.mubr.bf16.mxu0 0
    %540 = vmatmul.mubr.bf16.gmra.mrb[0].mxu0 %v276
    %v541 = vpop.f32.mrb[0].mxu0
    %v542 = vadd.f32 %v129, %v541
    %v543 = vpop.f32.mrb[0].mxu0
    %v544 = vpop.f32.mrb[0].mxu0
    %v545 = vadd.f32 %v129, %v544
    %v546 = vpop.f32.mrb[0].mxu0
    %547 = vmatprep.mubr.bf16.mxu0 0
    %548 = vmatmul.mubr.bf16.gmra.mrb[0].mxu0 %v277
    %v549 = vpop.f32.mrb[0].mxu0
    %v550 = vadd.f32 %v129, %v549
    %v551 = vpop.f32.mrb[0].mxu0
    %v552 = vpop.f32.mrb[0].mxu0
    %v553 = vadd.f32 %v129, %v552
    %v554 = vpop.f32.mrb[0].mxu0
    %555 = vmatprep.mubr.bf16.mxu0 0
    %556 = vmatmul.mubr.bf16.gmra.mrb[0].mxu0 %v278
    %v557 = vpop.f32.mrb[0].mxu0
    %v558 = vadd.f32 %v129, %v557
    %v559 = vpop.f32.mrb[0].mxu0
    %v560 = vpop.f32.mrb[0].mxu0
    %v561 = vadd.f32 %v129, %v560
    %v562 = vpop.f32.mrb[0].mxu0
    %563 = vmatprep.mubr.bf16.mxu0 0
    %564 = vmatmul.mubr.bf16.gmra.mrb[0].mxu0 %v279
    %v565 = vpop.f32.mrb[0].mxu0
    %v566 = vadd.f32 %v129, %v565
    %v567 = vpop.f32.mrb[0].mxu0
    %v568 = vpop.f32.mrb[0].mxu0
    %v569 = vadd.f32 %v129, %v568
    %v570 = vpop.f32.mrb[0].mxu0
    %571 = vmatprep.mubr.bf16.mxu0 0
    %572 = vmatmul.mubr.bf16.gmra.mrb[0].mxu0 %v280
    %v573 = vpop.f32.mrb[0].mxu0
    %v574 = vadd.f32 %v129, %v573
    %v575 = vpop.f32.mrb[0].mxu0
    %v576 = vpop.f32.mrb[0].mxu0
    %v577 = vadd.f32 %v129, %v576
    %v578 = vpop.f32.mrb[0].mxu0
    %579 = vmatprep.mubr.bf16.mxu0 0
    %580 = vmatmul.mubr.bf16.gmra.mrb[0].mxu0 %v281
    %v581 = vpop.f32.mrb[0].mxu0
    %v582 = vadd.f32 %v129, %v581
    %v583 = vpop.f32.mrb[0].mxu0
    %v584 = vpop.f32.mrb[0].mxu0
    %v585 = vadd.f32 %v129, %v584
    %v586 = vpop.f32.mrb[0].mxu0
    %587 = vmatprep.mubr.bf16.mxu0 0
    %588 = vmatmul.mubr.bf16.gmra.mrb[0].mxu0 %v282
    %v589 = vpop.f32.mrb[0].mxu0
    %v590 = vadd.f32 %v129, %v589
    %v591 = vpop.f32.mrb[0].mxu0
    %v592 = vpop.f32.mrb[0].mxu0
    %v593 = vadd.f32 %v129, %v592
    %v594 = vpop.f32.mrb[0].mxu0
    %595 = vmatprep.mubr.bf16.mxu0 0
    %596 = vmatmul.mubr.bf16.gmra.mrb[0].mxu0 %v283
    %v597 = vpop.f32.mrb[0].mxu0
    %v598 = vadd.f32 %v129, %v597
    %v599 = vpop.f32.mrb[0].mxu0
    %v600 = vpop.f32.mrb[0].mxu0
    %v601 = vadd.f32 %v129, %v600
    %v602 = vpop.f32.mrb[0].mxu0
    %603 = vmatprep.mubr.bf16.mxu0 0
    %604 = vmatmul.mubr.bf16.gmra.mrb[0].mxu0 %v284
    %v605 = vpop.f32.mrb[0].mxu0
    %v606 = vadd.f32 %v129, %v605
    %v607 = vpop.f32.mrb[0].mxu0
    %v608 = vpop.f32.mrb[0].mxu0
    %v609 = vadd.f32 %v129, %v608
    %v610 = vpop.f32.mrb[0].mxu0
    %611 = vmatprep.mubr.bf16.mxu0 0
    %612 = vmatmul.mubr.bf16.gmra.mrb[0].mxu0 %v285
    %v613 = vpop.f32.mrb[0].mxu0
    %v614 = vadd.f32 %v129, %v613
    %v615 = vpop.f32.mrb[0].mxu0
    %v616 = vpop.f32.mrb[0].mxu0
    %v617 = vadd.f32 %v129, %v616
    %v618 = vpop.f32.mrb[0].mxu0
    %619 = vmatprep.mubr.bf16.mxu0 0
    %620 = vmatmul.mubr.bf16.gmra.mrb[0].mxu0 %v286
    %v621 = vpop.f32.mrb[0].mxu0
    %v622 = vadd.f32 %v129, %v621
    %v623 = vpop.f32.mrb[0].mxu0
    %v624 = vpop.f32.mrb[0].mxu0
    %v625 = vadd.f32 %v129, %v624
    %v626 = vpop.f32.mrb[0].mxu0
    %627 = vmatprep.mubr.bf16.mxu0 0
    %628 = vmatmul.mubr.bf16.gmra.mrb[0].mxu0 %v287
    %v629 = vpop.f32.mrb[0].mxu0
    %v630 = vadd.f32 %v129, %v629
    %v631 = vpop.f32.mrb[0].mxu0
    %v632 = vpop.f32.mrb[0].mxu0
    %v633 = vadd.f32 %v129, %v632
    %v634 = vpop.f32.mrb[0].mxu0
    %635 = vmatprep.mubr.bf16.mxu0 0
    %636 = vmatmul.mubr.bf16.gmra.mrb[0].mxu0 %v288
    %v637 = vpop.f32.mrb[0].mxu0
    %v638 = vadd.f32 %v129, %v637
    %v639 = vpop.f32.mrb[0].mxu0
    %v640 = vpop.f32.mrb[0].mxu0
    %v641 = vadd.f32 %v129, %v640
    %v642 = vpop.f32.mrb[0].mxu0
    %643 = vmatprep.mubr.bf16.mxu0 0
    %644 = vmatmul.mubr.bf16.gmra.mrb[0].mxu0 %v289
    %v645 = vpop.f32.mrb[0].mxu0
    %v646 = vadd.f32 %v129, %v645
    %v647 = vpop.f32.mrb[0].mxu0
    %v648 = vpop.f32.mrb[0].mxu0
    %v649 = vadd.f32 %v129, %v648
    %v650 = vpop.f32.mrb[0].mxu0
    %651 = vmatprep.mubr.bf16.mxu0 0
    %652 = vmatmul.mubr.bf16.gmra.mrb[0].mxu0 %v290
    %v653 = vpop.f32.mrb[0].mxu0
    %v654 = vadd.f32 %v129, %v653
    %v655 = vpop.f32.mrb[0].mxu0
    %v656 = vpop.f32.mrb[0].mxu0
    %v657 = vadd.f32 %v129, %v656
    %v658 = vpop.f32.mrb[0].mxu0
    %659 = vdwg.mxu0
    %v660 = vxor.u32 %v406, 2147483648
    %v661 = vxor.u32 %v409, 2147483648
    %v662 = vxor.u32 %v414, 2147483648
    %v663 = vxor.u32 %v417, 2147483648
    %v664 = vxor.u32 %v422, 2147483648
    %v665 = vxor.u32 %v425, 2147483648
    %v666 = vxor.u32 %v430, 2147483648
    %v667 = vxor.u32 %v433, 2147483648
    %v668 = vxor.u32 %v438, 2147483648
    %v669 = vxor.u32 %v441, 2147483648
    %v670 = vxor.u32 %v446, 2147483648
    %v671 = vxor.u32 %v449, 2147483648
    %v672 = vxor.u32 %v454, 2147483648
    %v673 = vxor.u32 %v457, 2147483648
    %v674 = vxor.u32 %v462, 2147483648
    %v675 = vxor.u32 %v465, 2147483648
    %v676 = vxor.u32 %v470, 2147483648
    %v677 = vxor.u32 %v473, 2147483648
    %v678 = vxor.u32 %v478, 2147483648
    %v679 = vxor.u32 %v481, 2147483648
    %v680 = vxor.u32 %v486, 2147483648
    %v681 = vxor.u32 %v489, 2147483648
    %v682 = vxor.u32 %v494, 2147483648
    %v683 = vxor.u32 %v497, 2147483648
    %v684 = vxor.u32 %v502, 2147483648
    %v685 = vxor.u32 %v505, 2147483648
    %v686 = vxor.u32 %v510, 2147483648
    %v687 = vxor.u32 %v513, 2147483648
    %v688 = vxor.u32 %v518, 2147483648
    %v689 = vxor.u32 %v521, 2147483648
    %v690 = vxor.u32 %v526, 2147483648
    %v691 = vxor.u32 %v529, 2147483648
    %v692 = vxor.u32 %v534, 2147483648
    %v693 = vxor.u32 %v537, 2147483648
    %v694 = vxor.u32 %v542, 2147483648
    %v695 = vxor.u32 %v545, 2147483648
    %v696 = vxor.u32 %v550, 2147483648
    %v697 = vxor.u32 %v553, 2147483648
    %v698 = vxor.u32 %v558, 2147483648
    %v699 = vxor.u32 %v561, 2147483648
    %v700 = vxor.u32 %v566, 2147483648
    %v701 = vxor.u32 %v569, 2147483648
    %v702 = vxor.u32 %v574, 2147483648
    %v703 = vxor.u32 %v577, 2147483648
    %v704 = vxor.u32 %v582, 2147483648
    %v705 = vxor.u32 %v585, 2147483648
    %v706 = vxor.u32 %v590, 2147483648
    %v707 = vxor.u32 %v593, 2147483648
    %v708 = vxor.u32 %v598, 2147483648
    %v709 = vxor.u32 %v601, 2147483648
    %v710 = vxor.u32 %v606, 2147483648
    %v711 = vxor.u32 %v609, 2147483648
    %v712 = vxor.u32 %v614, 2147483648
    %v713 = vxor.u32 %v617, 2147483648
    %v714 = vxor.u32 %v622, 2147483648
    %v715 = vxor.u32 %v625, 2147483648
    %v716 = vxor.u32 %v630, 2147483648
    %v717 = vxor.u32 %v633, 2147483648
    %v718 = vxor.u32 %v638, 2147483648
    %v719 = vxor.u32 %v641, 2147483648
    %v720 = vxor.u32 %v646, 2147483648
    %v721 = vxor.u32 %v649, 2147483648
    %v722 = vxor.u32 %v654, 2147483648
    %v723 = vxor.u32 %v657, 2147483648
    %v724 = vmul.f32 %v660, 1.442695
    %v725 = vpow.pop %v724
    %v726 = vmul.f32 %v661, 1.442695
    %v727 = vpow.pop %v726
    %v728 = vmul.f32 %v662, 1.442695
    %v729 = vpow.pop %v728
    %v730 = vmul.f32 %v663, 1.442695
    %v731 = vpow.pop %v730
    %v732 = vmul.f32 %v664, 1.442695
    %v733 = vpow.pop %v732
    %v734 = vmul.f32 %v665, 1.442695
    %v735 = vpow.pop %v734
    %v736 = vmul.f32 %v666, 1.442695
    %v737 = vpow.pop %v736
    %v738 = vmul.f32 %v667, 1.442695
    %v739 = vpow.pop %v738
    %v740 = vmul.f32 %v668, 1.442695
    %v741 = vpow.pop %v740
    %v742 = vmul.f32 %v669, 1.442695
    %v743 = vpow.pop %v742
    %v744 = vmul.f32 %v670, 1.442695
    %v745 = vpow.pop %v744
    %v746 = vmul.f32 %v671, 1.442695
    %v747 = vpow.pop %v746
    %v748 = vmul.f32 %v672, 1.442695
    %v749 = vpow.pop %v748
    %v750 = vmul.f32 %v673, 1.442695
    %v751 = vpow.pop %v750
    %v752 = vmul.f32 %v674, 1.442695
    %v753 = vpow.pop %v752
    %v754 = vmul.f32 %v675, 1.442695
    %v755 = vpow.pop %v754
    %v756 = vmul.f32 %v676, 1.442695
    %v757 = vpow.pop %v756
    %v758 = vmul.f32 %v677, 1.442695
    %v759 = vpow.pop %v758
    %v760 = vmul.f32 %v678, 1.442695
    %v761 = vpow.pop %v760
    %v762 = vmul.f32 %v679, 1.442695
    %v763 = vpow.pop %v762
    %v764 = vmul.f32 %v680, 1.442695
    %v765 = vpow.pop %v764
    %v766 = vmul.f32 %v681, 1.442695
    %v767 = vpow.pop %v766
    %v768 = vmul.f32 %v682, 1.442695
    %v769 = vpow.pop %v768
    %v770 = vmul.f32 %v683, 1.442695
    %v771 = vpow.pop %v770
    %v772 = vmul.f32 %v684, 1.442695
    %v773 = vpow.pop %v772
    %v774 = vmul.f32 %v685, 1.442695
    %v775 = vpow.pop %v774
    %v776 = vmul.f32 %v686, 1.442695
    %v777 = vpow.pop %v776
    %v778 = vmul.f32 %v687, 1.442695
    %v779 = vpow.pop %v778
    %v780 = vmul.f32 %v688, 1.442695
    %v781 = vpow.pop %v780
    %v782 = vmul.f32 %v689, 1.442695
    %v783 = vpow.pop %v782
    %v784 = vmul.f32 %v690, 1.442695
    %v785 = vpow.pop %v784
    %v786 = vmul.f32 %v691, 1.442695
    %v787 = vpow.pop %v786
    %v788 = vmul.f32 %v692, 1.442695
    %v789 = vpow.pop %v788
    %v790 = vmul.f32 %v693, 1.442695
    %v791 = vpow.pop %v790
    %v792 = vmul.f32 %v694, 1.442695
    %v793 = vpow.pop %v792
    %v794 = vmul.f32 %v695, 1.442695
    %v795 = vpow.pop %v794
    %v796 = vmul.f32 %v696, 1.442695
    %v797 = vpow.pop %v796
    %v798 = vmul.f32 %v697, 1.442695
    %v799 = vpow.pop %v798
    %v800 = vmul.f32 %v698, 1.442695
    %v801 = vpow.pop %v800
    %v802 = vmul.f32 %v699, 1.442695
    %v803 = vpow.pop %v802
    %v804 = vmul.f32 %v700, 1.442695
    %v805 = vpow.pop %v804
    %v806 = vmul.f32 %v701, 1.442695
    %v807 = vpow.pop %v806
    %v808 = vmul.f32 %v702, 1.442695
    %v809 = vpow.pop %v808
    %v810 = vmul.f32 %v703, 1.442695
    %v811 = vpow.pop %v810
    %v812 = vmul.f32 %v704, 1.442695
    %v813 = vpow.pop %v812
    %v814 = vmul.f32 %v705, 1.442695
    %v815 = vpow.pop %v814
    %v816 = vmul.f32 %v706, 1.442695
    %v817 = vpow.pop %v816
    %v818 = vmul.f32 %v707, 1.442695
    %v819 = vpow.pop %v818
    %v820 = vmul.f32 %v708, 1.442695
    %v821 = vpow.pop %v820
    %v822 = vmul.f32 %v709, 1.442695
    %v823 = vpow.pop %v822
    %v824 = vmul.f32 %v710, 1.442695
    %v825 = vpow.pop %v824
    %v826 = vmul.f32 %v711, 1.442695
    %v827 = vpow.pop %v826
    %v828 = vmul.f32 %v712, 1.442695
    %v829 = vpow.pop %v828
    %v830 = vmul.f32 %v713, 1.442695
    %v831 = vpow.pop %v830
    %v832 = vmul.f32 %v714, 1.442695
    %v833 = vpow.pop %v832
    %v834 = vmul.f32 %v715, 1.442695
    %v835 = vpow.pop %v834
    %v836 = vmul.f32 %v716, 1.442695
    %v837 = vpow.pop %v836
    %v838 = vmul.f32 %v717, 1.442695
    %v839 = vpow.pop %v838
    %v840 = vmul.f32 %v718, 1.442695
    %v841 = vpow.pop %v840
    %v842 = vmul.f32 %v719, 1.442695
    %v843 = vpow.pop %v842
    %v844 = vmul.f32 %v720, 1.442695
    %v845 = vpow.pop %v844
    %v846 = vmul.f32 %v721, 1.442695
    %v847 = vpow.pop %v846
    %v848 = vmul.f32 %v722, 1.442695
    %v849 = vpow.pop %v848
    %v850 = vmul.f32 %v723, 1.442695
    %v851 = vpow.pop %v850
    %v852 = vadd.f32 %v725, 1.0
    %v853 = vadd.f32 %v727, 1.0
    %v854 = vadd.f32 %v729, 1.0
    %v855 = vadd.f32 %v731, 1.0
    %v856 = vadd.f32 %v733, 1.0
    %v857 = vadd.f32 %v735, 1.0
    %v858 = vadd.f32 %v737, 1.0
    %v859 = vadd.f32 %v739, 1.0
    %v860 = vadd.f32 %v741, 1.0
    %v861 = vadd.f32 %v743, 1.0
    %v862 = vadd.f32 %v745, 1.0
    %v863 = vadd.f32 %v747, 1.0
    %v864 = vadd.f32 %v749, 1.0
    %v865 = vadd.f32 %v751, 1.0
    %v866 = vadd.f32 %v753, 1.0
    %v867 = vadd.f32 %v755, 1.0
    %v868 = vadd.f32 %v757, 1.0
    %v869 = vadd.f32 %v759, 1.0
    %v870 = vadd.f32 %v761, 1.0
    %v871 = vadd.f32 %v763, 1.0
    %v872 = vadd.f32 %v765, 1.0
    %v873 = vadd.f32 %v767, 1.0
    %v874 = vadd.f32 %v769, 1.0
    %v875 = vadd.f32 %v771, 1.0
    %v876 = vadd.f32 %v773, 1.0
    %v877 = vadd.f32 %v775, 1.0
    %v878 = vadd.f32 %v777, 1.0
    %v879 = vadd.f32 %v779, 1.0
    %v880 = vadd.f32 %v781, 1.0
    %v881 = vadd.f32 %v783, 1.0
    %v882 = vadd.f32 %v785, 1.0
    %v883 = vadd.f32 %v787, 1.0
    %v884 = vadd.f32 %v789, 1.0
    %v885 = vadd.f32 %v791, 1.0
    %v886 = vadd.f32 %v793, 1.0
    %v887 = vadd.f32 %v795, 1.0
    %v888 = vadd.f32 %v797, 1.0
    %v889 = vadd.f32 %v799, 1.0
    %v890 = vadd.f32 %v801, 1.0
    %v891 = vadd.f32 %v803, 1.0
    %v892 = vadd.f32 %v805, 1.0
    %v893 = vadd.f32 %v807, 1.0
    %v894 = vadd.f32 %v809, 1.0
    %v895 = vadd.f32 %v811, 1.0
    %v896 = vadd.f32 %v813, 1.0
    %v897 = vadd.f32 %v815, 1.0
    %v898 = vadd.f32 %v817, 1.0
    %v899 = vadd.f32 %v819, 1.0
    %v900 = vadd.f32 %v821, 1.0
    %v901 = vadd.f32 %v823, 1.0
    %v902 = vadd.f32 %v825, 1.0
    %v903 = vadd.f32 %v827, 1.0
    %v904 = vadd.f32 %v829, 1.0
    %v905 = vadd.f32 %v831, 1.0
    %v906 = vadd.f32 %v833, 1.0
    %v907 = vadd.f32 %v835, 1.0
    %v908 = vadd.f32 %v837, 1.0
    %v909 = vadd.f32 %v839, 1.0
    %v910 = vadd.f32 %v841, 1.0
    %v911 = vadd.f32 %v843, 1.0
    %v912 = vadd.f32 %v845, 1.0
    %v913 = vadd.f32 %v847, 1.0
    %v914 = vadd.f32 %v849, 1.0
    %v915 = vadd.f32 %v851, 1.0
    %v916 = vrcp.pop %v852
    %v917 = vmul.f32 1.0, %v916
    %v918 = vrcp.pop %v853
    %v919 = vmul.f32 1.0, %v918
    %v920 = vrcp.pop %v854
    %v921 = vmul.f32 1.0, %v920
    %v922 = vrcp.pop %v855
    %v923 = vmul.f32 1.0, %v922
    %v924 = vrcp.pop %v856
    %v925 = vmul.f32 1.0, %v924
    %v926 = vrcp.pop %v857
    %v927 = vmul.f32 1.0, %v926
    %v928 = vrcp.pop %v858
    %v929 = vmul.f32 1.0, %v928
    %v930 = vrcp.pop %v859
    %v931 = vmul.f32 1.0, %v930
    %v932 = vrcp.pop %v860
    %v933 = vmul.f32 1.0, %v932
    %v934 = vrcp.pop %v861
    %v935 = vmul.f32 1.0, %v934
    %v936 = vrcp.pop %v862
    %v937 = vmul.f32 1.0, %v936
    %v938 = vrcp.pop %v863
    %v939 = vmul.f32 1.0, %v938
    %v940 = vrcp.pop %v864
    %v941 = vmul.f32 1.0, %v940
    %v942 = vrcp.pop %v865
    %v943 = vmul.f32 1.0, %v942
    %v944 = vrcp.pop %v866
    %v945 = vmul.f32 1.0, %v944
    %v946 = vrcp.pop %v867
    %v947 = vmul.f32 1.0, %v946
    %v948 = vrcp.pop %v868
    %v949 = vmul.f32 1.0, %v948
    %v950 = vrcp.pop %v869
    %v951 = vmul.f32 1.0, %v950
    %v952 = vrcp.pop %v870
    %v953 = vmul.f32 1.0, %v952
    %v954 = vrcp.pop %v871
    %v955 = vmul.f32 1.0, %v954
    %v956 = vrcp.pop %v872
    %v957 = vmul.f32 1.0, %v956
    %v958 = vrcp.pop %v873
    %v959 = vmul.f32 1.0, %v958
    %v960 = vrcp.pop %v874
    %v961 = vmul.f32 1.0, %v960
    %v962 = vrcp.pop %v875
    %v963 = vmul.f32 1.0, %v962
    %v964 = vrcp.pop %v876
    %v965 = vmul.f32 1.0, %v964
    %v966 = vrcp.pop %v877
    %v967 = vmul.f32 1.0, %v966
    %v968 = vrcp.pop %v878
    %v969 = vmul.f32 1.0, %v968
    %v970 = vrcp.pop %v879
    %v971 = vmul.f32 1.0, %v970
    %v972 = vrcp.pop %v880
    %v973 = vmul.f32 1.0, %v972
    %v974 = vrcp.pop %v881
    %v975 = vmul.f32 1.0, %v974
    %v976 = vrcp.pop %v882
    %v977 = vmul.f32 1.0, %v976
    %v978 = vrcp.pop %v883
    %v979 = vmul.f32 1.0, %v978
    %v980 = vrcp.pop %v884
    %v981 = vmul.f32 1.0, %v980
    %v982 = vrcp.pop %v885
    %v983 = vmul.f32 1.0, %v982
    %v984 = vrcp.pop %v886
    %v985 = vmul.f32 1.0, %v984
    %v986 = vrcp.pop %v887
    %v987 = vmul.f32 1.0, %v986
    %v988 = vrcp.pop %v888
    %v989 = vmul.f32 1.0, %v988
    %v990 = vrcp.pop %v889
    %v991 = vmul.f32 1.0, %v990
    %v992 = vrcp.pop %v890
    %v993 = vmul.f32 1.0, %v992
    %v994 = vrcp.pop %v891
    %v995 = vmul.f32 1.0, %v994
    %v996 = vrcp.pop %v892
    %v997 = vmul.f32 1.0, %v996
    %v998 = vrcp.pop %v893
    %v999 = vmul.f32 1.0, %v998
    %v1000 = vrcp.pop %v894
    %v1001 = vmul.f32 1.0, %v1000
    %v1002 = vrcp.pop %v895
    %v1003 = vmul.f32 1.0, %v1002
    %v1004 = vrcp.pop %v896
    %v1005 = vmul.f32 1.0, %v1004
    %v1006 = vrcp.pop %v897
    %v1007 = vmul.f32 1.0, %v1006
    %v1008 = vrcp.pop %v898
    %v1009 = vmul.f32 1.0, %v1008
    %v1010 = vrcp.pop %v899
    %v1011 = vmul.f32 1.0, %v1010
    %v1012 = vrcp.pop %v900
    %v1013 = vmul.f32 1.0, %v1012
    %v1014 = vrcp.pop %v901
    %v1015 = vmul.f32 1.0, %v1014
    %v1016 = vrcp.pop %v902
    %v1017 = vmul.f32 1.0, %v1016
    %v1018 = vrcp.pop %v903
    %v1019 = vmul.f32 1.0, %v1018
    %v1020 = vrcp.pop %v904
    %v1021 = vmul.f32 1.0, %v1020
    %v1022 = vrcp.pop %v905
    %v1023 = vmul.f32 1.0, %v1022
    %v1024 = vrcp.pop %v906
    %v1025 = vmul.f32 1.0, %v1024
    %v1026 = vrcp.pop %v907
    %v1027 = vmul.f32 1.0, %v1026
    %v1028 = vrcp.pop %v908
    %v1029 = vmul.f32 1.0, %v1028
    %v1030 = vrcp.pop %v909
    %v1031 = vmul.f32 1.0, %v1030
    %v1032 = vrcp.pop %v910
    %v1033 = vmul.f32 1.0, %v1032
    %v1034 = vrcp.pop %v911
    %v1035 = vmul.f32 1.0, %v1034
    %v1036 = vrcp.pop %v912
    %v1037 = vmul.f32 1.0, %v1036
    %v1038 = vrcp.pop %v913
    %v1039 = vmul.f32 1.0, %v1038
    %v1040 = vrcp.pop %v914
    %v1041 = vmul.f32 1.0, %v1040
    %v1042 = vrcp.pop %v915
    %v1043 = vmul.f32 1.0, %v1042
    %v1044 = vmul.f32 %v406, %v917
    %v1045 = vmul.f32 %v409, %v919
    %v1046 = vmul.f32 %v414, %v921
    %v1047 = vmul.f32 %v417, %v923
    %v1048 = vmul.f32 %v422, %v925
    %v1049 = vmul.f32 %v425, %v927
    %v1050 = vmul.f32 %v430, %v929
    %v1051 = vmul.f32 %v433, %v931
    %v1052 = vmul.f32 %v438, %v933
    %v1053 = vmul.f32 %v441, %v935
    %v1054 = vmul.f32 %v446, %v937
    %v1055 = vmul.f32 %v449, %v939
    %v1056 = vmul.f32 %v454, %v941
    %v1057 = vmul.f32 %v457, %v943
    %v1058 = vmul.f32 %v462, %v945
    %v1059 = vmul.f32 %v465, %v947
    %v1060 = vmul.f32 %v470, %v949
    %v1061 = vmul.f32 %v473, %v951
    %v1062 = vmul.f32 %v478, %v953
    %v1063 = vmul.f32 %v481, %v955
    %v1064 = vmul.f32 %v486, %v957
    %v1065 = vmul.f32 %v489, %v959
    %v1066 = vmul.f32 %v494, %v961
    %v1067 = vmul.f32 %v497, %v963
    %v1068 = vmul.f32 %v502, %v965
    %v1069 = vmul.f32 %v505, %v967
    %v1070 = vmul.f32 %v510, %v969
    %v1071 = vmul.f32 %v513, %v971
    %v1072 = vmul.f32 %v518, %v973
    %v1073 = vmul.f32 %v521, %v975
    %v1074 = vmul.f32 %v526, %v977
    %v1075 = vmul.f32 %v529, %v979
    %v1076 = vmul.f32 %v534, %v981
    %v1077 = vmul.f32 %v537, %v983
    %v1078 = vmul.f32 %v542, %v985
    %v1079 = vmul.f32 %v545, %v987
    %v1080 = vmul.f32 %v550, %v989
    %v1081 = vmul.f32 %v553, %v991
    %v1082 = vmul.f32 %v558, %v993
    %v1083 = vmul.f32 %v561, %v995
    %v1084 = vmul.f32 %v566, %v997
    %v1085 = vmul.f32 %v569, %v999
    %v1086 = vmul.f32 %v574, %v1001
    %v1087 = vmul.f32 %v577, %v1003
    %v1088 = vmul.f32 %v582, %v1005
    %v1089 = vmul.f32 %v585, %v1007
    %v1090 = vmul.f32 %v590, %v1009
    %v1091 = vmul.f32 %v593, %v1011
    %v1092 = vmul.f32 %v598, %v1013
    %v1093 = vmul.f32 %v601, %v1015
    %v1094 = vmul.f32 %v606, %v1017
    %v1095 = vmul.f32 %v609, %v1019
    %v1096 = vmul.f32 %v614, %v1021
    %v1097 = vmul.f32 %v617, %v1023
    %v1098 = vmul.f32 %v622, %v1025
    %v1099 = vmul.f32 %v625, %v1027
    %v1100 = vmul.f32 %v630, %v1029
    %v1101 = vmul.f32 %v633, %v1031
    %v1102 = vmul.f32 %v638, %v1033
    %v1103 = vmul.f32 %v641, %v1035
    %v1104 = vmul.f32 %v646, %v1037
    %v1105 = vmul.f32 %v649, %v1039
    %v1106 = vmul.f32 %v654, %v1041
    %v1107 = vmul.f32 %v657, %v1043
    %v1108 = vpack.c.bf16 %v1045, %v1044
    %v1109 = vpack.c.bf16 %v1047, %v1046
    %v1110 = vpack.c.bf16 %v1049, %v1048
    %v1111 = vpack.c.bf16 %v1051, %v1050
    %v1112 = vpack.c.bf16 %v1053, %v1052
    %v1113 = vpack.c.bf16 %v1055, %v1054
    %v1114 = vpack.c.bf16 %v1057, %v1056
    %v1115 = vpack.c.bf16 %v1059, %v1058
    %v1116 = vpack.c.bf16 %v1061, %v1060
    %v1117 = vpack.c.bf16 %v1063, %v1062
    %v1118 = vpack.c.bf16 %v1065, %v1064
    %v1119 = vpack.c.bf16 %v1067, %v1066
    %v1120 = vpack.c.bf16 %v1069, %v1068
    %v1121 = vpack.c.bf16 %v1071, %v1070
    %v1122 = vpack.c.bf16 %v1073, %v1072
    %v1123 = vpack.c.bf16 %v1075, %v1074
    %v1124 = vpack.c.bf16 %v1077, %v1076
    %v1125 = vpack.c.bf16 %v1079, %v1078
    %v1126 = vpack.c.bf16 %v1081, %v1080
    %v1127 = vpack.c.bf16 %v1083, %v1082
    %v1128 = vpack.c.bf16 %v1085, %v1084
    %v1129 = vpack.c.bf16 %v1087, %v1086
    %v1130 = vpack.c.bf16 %v1089, %v1088
    %v1131 = vpack.c.bf16 %v1091, %v1090
    %v1132 = vpack.c.bf16 %v1093, %v1092
    %v1133 = vpack.c.bf16 %v1095, %v1094
    %v1134 = vpack.c.bf16 %v1097, %v1096
    %v1135 = vpack.c.bf16 %v1099, %v1098
    %v1136 = vpack.c.bf16 %v1101, %v1100
    %v1137 = vpack.c.bf16 %v1103, %v1102
    %v1138 = vpack.c.bf16 %v1105, %v1104
    %v1139 = vpack.c.bf16 %v1107, %v1106
    %v1172 = vunpack.c.l.b16 %v1108
    %v1173 = vunpack.c.h.b16 %v1108
    %v1174 = vunpack.c.l.b16 %v1109
    %v1175 = vunpack.c.h.b16 %v1109
    %v1176 = vunpack.c.l.b16 %v1110
    %v1177 = vunpack.c.h.b16 %v1110
    %v1178 = vunpack.c.l.b16 %v1111
    %v1179 = vunpack.c.h.b16 %v1111
    %v1180 = vunpack.c.l.b16 %v1112
    %v1181 = vunpack.c.h.b16 %v1112
    %v1182 = vunpack.c.l.b16 %v1113
    %v1183 = vunpack.c.h.b16 %v1113
    %v1184 = vunpack.c.l.b16 %v1114
    %v1185 = vunpack.c.h.b16 %v1114
    %v1186 = vunpack.c.l.b16 %v1115
    %v1187 = vunpack.c.h.b16 %v1115
    %v1188 = vunpack.c.l.b16 %v1116
    %v1189 = vunpack.c.h.b16 %v1116
    %v1190 = vunpack.c.l.b16 %v1117
    %v1191 = vunpack.c.h.b16 %v1117
    %v1192 = vunpack.c.l.b16 %v1118
    %v1193 = vunpack.c.h.b16 %v1118
    %v1194 = vunpack.c.l.b16 %v1119
    %v1195 = vunpack.c.h.b16 %v1119
    %v1196 = vunpack.c.l.b16 %v1120
    %v1197 = vunpack.c.h.b16 %v1120
    %v1198 = vunpack.c.l.b16 %v1121
    %v1199 = vunpack.c.h.b16 %v1121
    %v1200 = vunpack.c.l.b16 %v1122
    %v1201 = vunpack.c.h.b16 %v1122
    %v1202 = vunpack.c.l.b16 %v1123
    %v1203 = vunpack.c.h.b16 %v1123
    %v1204 = vunpack.c.l.b16 %v1124
    %v1205 = vunpack.c.h.b16 %v1124
    %v1206 = vunpack.c.l.b16 %v1125
    %v1207 = vunpack.c.h.b16 %v1125
    %v1208 = vunpack.c.l.b16 %v1126
    %v1209 = vunpack.c.h.b16 %v1126
    %v1210 = vunpack.c.l.b16 %v1127
    %v1211 = vunpack.c.h.b16 %v1127
    %v1212 = vunpack.c.l.b16 %v1128
    %v1213 = vunpack.c.h.b16 %v1128
    %v1214 = vunpack.c.l.b16 %v1129
    %v1215 = vunpack.c.h.b16 %v1129
    %v1216 = vunpack.c.l.b16 %v1130
    %v1217 = vunpack.c.h.b16 %v1130
    %v1218 = vunpack.c.l.b16 %v1131
    %v1219 = vunpack.c.h.b16 %v1131
    %v1220 = vunpack.c.l.b16 %v1132
    %v1221 = vunpack.c.h.b16 %v1132
    %v1222 = vunpack.c.l.b16 %v1133
    %v1223 = vunpack.c.h.b16 %v1133
    %v1224 = vunpack.c.l.b16 %v1134
    %v1225 = vunpack.c.h.b16 %v1134
    %v1226 = vunpack.c.l.b16 %v1135
    %v1227 = vunpack.c.h.b16 %v1135
    %v1228 = vunpack.c.l.b16 %v1136
    %v1229 = vunpack.c.h.b16 %v1136
    %v1230 = vunpack.c.l.b16 %v1137
    %v1231 = vunpack.c.h.b16 %v1137
    %v1232 = vunpack.c.l.b16 %v1138
    %v1233 = vunpack.c.h.b16 %v1138
    %v1234 = vunpack.c.l.b16 %v1139
    %v1235 = vunpack.c.h.b16 %v1139
    %v1236 = vpack.c.b16 %v1172, %v1172
    %v1237 = vpack.c.b16 %v1173, %v1173
    %v1238 = vpack.c.b16 %v1174, %v1174
    %v1239 = vpack.c.b16 %v1175, %v1175
    %v1240 = vpack.c.b16 %v1176, %v1176
    %v1241 = vpack.c.b16 %v1177, %v1177
    %v1242 = vpack.c.b16 %v1178, %v1178
    %v1243 = vpack.c.b16 %v1179, %v1179
    %v1244 = vpack.c.b16 %v1180, %v1180
    %v1245 = vpack.c.b16 %v1181, %v1181
    %v1246 = vpack.c.b16 %v1182, %v1182
    %v1247 = vpack.c.b16 %v1183, %v1183
    %v1248 = vpack.c.b16 %v1184, %v1184
    %v1249 = vpack.c.b16 %v1185, %v1185
    %v1250 = vpack.c.b16 %v1186, %v1186
    %v1251 = vpack.c.b16 %v1187, %v1187
    %v1252 = vpack.c.b16 %v1188, %v1188
    %v1253 = vpack.c.b16 %v1189, %v1189
    %v1254 = vpack.c.b16 %v1190, %v1190
    %v1255 = vpack.c.b16 %v1191, %v1191
    %v1256 = vpack.c.b16 %v1192, %v1192
    %v1257 = vpack.c.b16 %v1193, %v1193
    %v1258 = vpack.c.b16 %v1194, %v1194
    %v1259 = vpack.c.b16 %v1195, %v1195
    %v1260 = vpack.c.b16 %v1196, %v1196
    %v1261 = vpack.c.b16 %v1197, %v1197
    %v1262 = vpack.c.b16 %v1198, %v1198
    %v1263 = vpack.c.b16 %v1199, %v1199
    %v1264 = vpack.c.b16 %v1200, %v1200
    %v1265 = vpack.c.b16 %v1201, %v1201
    %v1266 = vpack.c.b16 %v1202, %v1202
    %v1267 = vpack.c.b16 %v1203, %v1203
    %v1268 = vpack.c.b16 %v1204, %v1204
    %v1269 = vpack.c.b16 %v1205, %v1205
    %v1270 = vpack.c.b16 %v1206, %v1206
    %v1271 = vpack.c.b16 %v1207, %v1207
    %v1272 = vpack.c.b16 %v1208, %v1208
    %v1273 = vpack.c.b16 %v1209, %v1209
    %v1274 = vpack.c.b16 %v1210, %v1210
    %v1275 = vpack.c.b16 %v1211, %v1211
    %v1276 = vpack.c.b16 %v1212, %v1212
    %v1277 = vpack.c.b16 %v1213, %v1213
    %v1278 = vpack.c.b16 %v1214, %v1214
    %v1279 = vpack.c.b16 %v1215, %v1215
    %v1280 = vpack.c.b16 %v1216, %v1216
    %v1281 = vpack.c.b16 %v1217, %v1217
    %v1282 = vpack.c.b16 %v1218, %v1218
    %v1283 = vpack.c.b16 %v1219, %v1219
    %v1284 = vpack.c.b16 %v1220, %v1220
    %v1285 = vpack.c.b16 %v1221, %v1221
    %v1286 = vpack.c.b16 %v1222, %v1222
    %v1287 = vpack.c.b16 %v1223, %v1223
    %v1288 = vpack.c.b16 %v1224, %v1224
    %v1289 = vpack.c.b16 %v1225, %v1225
    %v1290 = vpack.c.b16 %v1226, %v1226
    %v1291 = vpack.c.b16 %v1227, %v1227
    %v1292 = vpack.c.b16 %v1228, %v1228
    %v1293 = vpack.c.b16 %v1229, %v1229
    %v1294 = vpack.c.b16 %v1230, %v1230
    %v1295 = vpack.c.b16 %v1231, %v1231
    %v1296 = vpack.c.b16 %v1232, %v1232
    %v1297 = vpack.c.b16 %v1233, %v1233
    %v1298 = vpack.c.b16 %v1234, %v1234
    %v1299 = vpack.c.b16 %v1235, %v1235
    %1364 = vst [vmem:[#allocation7] sm:$0xf] %v1236
    %1365 = vst [vmem:[#allocation7 + $0x4] sm:$0xf] %v1237
    %1366 = vst [vmem:[#allocation7 + $0x8] sm:$0xf] %v1238
    %1367 = vst [vmem:[#allocation7 + $0xc] sm:$0xf] %v1239
    %1368 = vst [vmem:[#allocation7 + $0x10] sm:$0xf] %v1240
    %1369 = vst [vmem:[#allocation7 + $0x14] sm:$0xf] %v1241
    %1370 = vst [vmem:[#allocation7 + $0x18] sm:$0xf] %v1242
    %1371 = vst [vmem:[#allocation7 + $0x1c] sm:$0xf] %v1243
    %1372 = vst [vmem:[#allocation7 + $0x20] sm:$0xf] %v1244
    %1373 = vst [vmem:[#allocation7 + $0x24] sm:$0xf] %v1245
    %1374 = vst [vmem:[#allocation7 + $0x28] sm:$0xf] %v1246
    %1375 = vst [vmem:[#allocation7 + $0x2c] sm:$0xf] %v1247
    %1376 = vst [vmem:[#allocation7 + $0x30] sm:$0xf] %v1248
    %1377 = vst [vmem:[#allocation7 + $0x34] sm:$0xf] %v1249
    %1378 = vst [vmem:[#allocation7 + $0x38] sm:$0xf] %v1250
    %1379 = vst [vmem:[#allocation7 + $0x3c] sm:$0xf] %v1251
    %1380 = vst [vmem:[#allocation7 + $0x40] sm:$0xf] %v1252
    %1381 = vst [vmem:[#allocation7 + $0x44] sm:$0xf] %v1253
    %1382 = vst [vmem:[#allocation7 + $0x48] sm:$0xf] %v1254
    %1383 = vst [vmem:[#allocation7 + $0x4c] sm:$0xf] %v1255
    %1384 = vst [vmem:[#allocation7 + $0x50] sm:$0xf] %v1256
    %1385 = vst [vmem:[#allocation7 + $0x54] sm:$0xf] %v1257
    %1386 = vst [vmem:[#allocation7 + $0x58] sm:$0xf] %v1258
    %1387 = vst [vmem:[#allocation7 + $0x5c] sm:$0xf] %v1259
    %1388 = vst [vmem:[#allocation7 + $0x60] sm:$0xf] %v1260
    %1389 = vst [vmem:[#allocation7 + $0x64] sm:$0xf] %v1261
    %1390 = vst [vmem:[#allocation7 + $0x68] sm:$0xf] %v1262
    %1391 = vst [vmem:[#allocation7 + $0x6c] sm:$0xf] %v1263
    %1392 = vst [vmem:[#allocation7 + $0x70] sm:$0xf] %v1264
    %1393 = vst [vmem:[#allocation7 + $0x74] sm:$0xf] %v1265
    %1394 = vst [vmem:[#allocation7 + $0x78] sm:$0xf] %v1266
    %1395 = vst [vmem:[#allocation7 + $0x7c] sm:$0xf] %v1267
    %1396 = vst [vmem:[#allocation7 + $0x80] sm:$0xf] %v1268
    %1397 = vst [vmem:[#allocation7 + $0x84] sm:$0xf] %v1269
    %1398 = vst [vmem:[#allocation7 + $0x88] sm:$0xf] %v1270
    %1399 = vst [vmem:[#allocation7 + $0x8c] sm:$0xf] %v1271
    %1400 = vst [vmem:[#allocation7 + $0x90] sm:$0xf] %v1272
    %1401 = vst [vmem:[#allocation7 + $0x94] sm:$0xf] %v1273
    %1402 = vst [vmem:[#allocation7 + $0x98] sm:$0xf] %v1274
    %1403 = vst [vmem:[#allocation7 + $0x9c] sm:$0xf] %v1275
    %1404 = vst [vmem:[#allocation7 + $0xa0] sm:$0xf] %v1276
    %1405 = vst [vmem:[#allocation7 + $0xa4] sm:$0xf] %v1277
    %1406 = vst [vmem:[#allocation7 + $0xa8] sm:$0xf] %v1278
    %1407 = vst [vmem:[#allocation7 + $0xac] sm:$0xf] %v1279
    %1408 = vst [vmem:[#allocation7 + $0xb0] sm:$0xf] %v1280
    %1409 = vst [vmem:[#allocation7 + $0xb4] sm:$0xf] %v1281
    %1410 = vst [vmem:[#allocation7 + $0xb8] sm:$0xf] %v1282
    %1411 = vst [vmem:[#allocation7 + $0xbc] sm:$0xf] %v1283
    %1412 = vst [vmem:[#allocation7 + $0xc0] sm:$0xf] %v1284
    %1413 = vst [vmem:[#allocation7 + $0xc4] sm:$0xf] %v1285
    %1414 = vst [vmem:[#allocation7 + $0xc8] sm:$0xf] %v1286
    %1415 = vst [vmem:[#allocation7 + $0xcc] sm:$0xf] %v1287
    %1416 = vst [vmem:[#allocation7 + $0xd0] sm:$0xf] %v1288
    %1417 = vst [vmem:[#allocation7 + $0xd4] sm:$0xf] %v1289
    %1418 = vst [vmem:[#allocation7 + $0xd8] sm:$0xf] %v1290
    %1419 = vst [vmem:[#allocation7 + $0xdc] sm:$0xf] %v1291
    %1420 = vst [vmem:[#allocation7 + $0xe0] sm:$0xf] %v1292
    %1421 = vst [vmem:[#allocation7 + $0xe4] sm:$0xf] %v1293
    %1422 = vst [vmem:[#allocation7 + $0xe8] sm:$0xf] %v1294
    %1423 = vst [vmem:[#allocation7 + $0xec] sm:$0xf] %v1295
    %1424 = vst [vmem:[#allocation7 + $0xf0] sm:$0xf] %v1296
    %1425 = vst [vmem:[#allocation7 + $0xf4] sm:$0xf] %v1297
    %1426 = vst [vmem:[#allocation7 + $0xf8] sm:$0xf] %v1298
    %1427 = vst [vmem:[#allocation7 + $0xfc] sm:$0xf] %v1299
    // Predicated region
    $region22: #{tpu_custom_call.1} parent=1 // pred_check
      _
    $region23: #{tpu_custom_call.1} parent=1 // pred_check_branch
      %1429 = sbr.rel (0) target = $region25
    $region24: #{tpu_custom_call.1} parent=1 // pred_region
      %s1431 = ssub.s32 4096, 4096
      %1432 = vsyncadd [#allocation4], %s1431
      %s1433 = sshll.u32 [#allocation7], 4
      %s1434 = int_to_ptr.vmem [resolvable:$true] %s1433
      %1439 = dma.vmem_to_hbm [thread:$0]  %s1434, 4096, %s3, [#allocation4], 64, 64, 4
    $region25: #{tpu_custom_call.1} parent=1 // pred_fallthru
      _
    // Predicated region
    $region26: #{tpu_custom_call.1} parent=1 // pred_check
      _
    $region27: #{tpu_custom_call.1} parent=1 // pred_check_branch
      %1441 = sbr.rel (0) target = $region29
    $region28: #{tpu_custom_call.1} parent=1 // pred_region
      %1442 = dma.done [#allocation4], 4096
    $region29: #{tpu_custom_call.1} parent=1 // pred_fallthru
      _
    %1443 = vsyncpa [#allocation3], 1
    %1444 = vsyncpa [#allocation6], 1
    %1445 = vsyncpa [#allocation4], 1

</llo_original>
